<compile_context>
chip_gen: v6e
topology: v6e:2x2x1
jax: 0.10.0
libtpu: 0.0.40
codegen_flags: <defaults>
</compile_context>

<pallas_src>
import jax
import jax.numpy as jnp
from jax import lax
from jax.experimental import pallas as pl
from jax.experimental.pallas import tpu as pltpu


def _round_up(x, m):
    return (x + m - 1) // m * m


def _landmark_head_kernel(x_ref, w_ref, b_ref, o_ref):
    # x_ref: (Cin, t_hw)   activation tile, NCHW layout (pixels on lanes)
    # w_ref: (Cin, Cout)   full 1x1-conv weight (constant index_map -> resident)
    # b_ref: (1, Cout)     bias, f32
    # o_ref: (t_hw, Cout)            NHWC tile, or
    #        (t_hw*Cout//128, 128)   lane-dense view of the same bytes
    acc = lax.dot_general(
        x_ref[...], w_ref[...],
        dimension_numbers=(((0,), (0,)), ((), ())),   # contract Cin: x.T @ W
        preferred_element_type=jnp.float32)           # f32 MXU accumulator
    y = (acc + b_ref[...]).astype(o_ref.dtype)
    # No-op in the fallback layout; in the lane-dense layout this is the
    # on-chip relayout to 128 dense lanes (~0.1-0.25 MiB of on-chip work per
    # tile, cheap next to the strided HBM writeback it eliminates).
    o_ref[...] = y.reshape(o_ref.shape)


def landmark_head_forward(x_nchw, w, b, num_anchors, *,
                          tile_hw=2048, out_dtype=None):
    """1x1 conv + permute(0,2,3,1) + view(N, -1, 10).

    x_nchw: (N, Cin, H, W)  activations (f32 or bf16)
    w:      (Cin, Cout)     conv weight; the PyTorch (Cout, Cin, 1, 1) weight
                            must be passed as w_torch.reshape(Cout, Cin).T
    b:      (Cout,)         conv bias
    Returns (N, H*W*num_anchors, 10); dtype defaults to x_nchw.dtype.
    """
    N, Cin, H, W = x_nchw.shape
    Cout = num_anchors * 10
    assert w.shape == (Cin, Cout), (
        f"w must be (Cin, Cout)=({Cin},{Cout}) — i.e. the PyTorch "
        f"(Cout, Cin, 1, 1) weight reshaped+transposed — got {w.shape}")
    assert b.shape == (Cout,), b.shape
    HW = H * W
    if out_dtype is None:
        out_dtype = x_nchw.dtype     # bf16 in -> bf16 out: halves writeback bytes

    x3 = x_nchw.reshape(N, Cin, HW)  # free view: spatial dims are contiguous

    # Lane-dense output is possible when the flat NHWC length is 128-aligned
    # (all power-of-two RetinaFace levels: 80x80, 40x40, 16x16, ...).
    lane_dense = (HW * Cout) % 128 == 0

    # ---- pixel-tile selection (no padding: Pallas handles the ragged last tile)
    if HW <= tile_hw:
        t_hw = HW
        if N == 1 and HW >= 256:
            # v7x has 2 TensorCores fed by the "parallel" grid axes; make sure
            # a batch-1 level still exposes >= 2 units of parallel work.
            half = _round_up((HW + 1) // 2, 128)
            if half < HW and (not lane_dense or (half * Cout) % 1024 == 0):
                t_hw = half
    else:
        t_hw = max(128, (min(tile_hw, HW) // 128) * 128)
        if lane_dense:
            # Multi-tile lane-dense blocks are (t_hw*Cout//128, 128); the
            # sublane extent must be a multiple of 8 -> t_hw*Cout % 1024 == 0.
            while t_hw > 128 and (t_hw * Cout) % 1024 != 0:
                t_hw -= 128
            if (t_hw * Cout) % 1024 != 0:
                lane_dense = False
    n_tiles = pl.cdiv(HW, t_hw)
    grid = (N, n_tiles)

    # Double-buffered VMEM working set (Cin=512 bf16, t_hw=2048):
    #   x: 2*Cin*t_hw*2B ~= 4 MiB, out: 2*t_hw*Cout*4B ~= 0.5 MiB, w/b < 0.1 MiB
    # -> well under the 16 MiB (v5e) / 32 MiB (v6e, v7x) default scoped VMEM.
    wc = w.astype(x3.dtype)                       # tiny; stays VMEM-resident
    b2 = b.astype(jnp.float32).reshape(1, Cout)   # bias add kept in f32

    cost = pl.CostEstimate(
        flops=2 * N * n_tiles * t_hw * Cin * Cout,
        transcendentals=0,
        bytes_accessed=(N * Cin * HW * x3.dtype.itemsize
                        + wc.size * wc.dtype.itemsize + b2.size * 4
                        + N * HW * Cout * jnp.dtype(out_dtype).itemsize))

    def run(dense_out):
        if dense_out:
            out_shape = jax.ShapeDtypeStruct((N, HW * Cout // 128, 128), out_dtype)
            out_spec = pl.BlockSpec((None, t_hw * Cout // 128, 128),
                                    lambda n, j: (n, j, 0))
        else:
            out_shape = jax.ShapeDtypeStruct((N, HW, Cout), out_dtype)
            out_spec = pl.BlockSpec((None, t_hw, Cout), lambda n, j: (n, j, 0))
        return pl.pallas_call(
            _landmark_head_kernel,
            out_shape=out_shape,
            grid_spec=pltpu.PrefetchScalarGridSpec(
                num_scalar_prefetch=0,
                grid=grid,
                in_specs=[
                    # (1, Cin, t_hw) activation tile; batch dim squeezed.
                    pl.BlockSpec((None, Cin, t_hw), lambda n, j: (n, 0, j)),
                    # Weight / bias: constant index_map -> resident (their
                    # default double buffers total < 0.1 MiB, so no custom
                    # pipeline_mode is needed).
                    pl.BlockSpec((Cin, Cout), lambda n, j: (0, 0)),
                    pl.BlockSpec((1, Cout), lambda n, j: (0, 0)),
                ],
                out_specs=out_spec,
            ),
            compiler_params=pltpu.CompilerParams(
                dimension_semantics=("parallel", "parallel")),
            cost_estimate=cost,
        )(x3, wc, b2)

    if lane_dense:
        try:
            y = run(True)
        except Exception:
            # Some Mosaic versions reject the in-kernel (t_hw, Cout) ->
            # (t_hw*Cout//128, 128) relayout; the direct NHWC store is still a
            # single HBM pass, just with narrower writeback DMAs.
            # (Eager fallback: assumes this wrapper itself is not jitted.)
            y = run(False)
    else:
        y = run(False)

    # Both output layouts have identical row-major byte order == NHWC, so this
    # final reshape (== permute(0,2,3,1).contiguous().view(N,-1,10)) is free.
    return y.reshape(N, HW * num_anchors, 10)


def _reference(x_nchw, w, b, num_anchors):
    # Pure-JAX reference (f32 math) for the 1x1 conv + permute + view.
    N, Cin, H, W = x_nchw.shape
    y = jnp.einsum("nchw,co->nhwo",
                   x_nchw.astype(jnp.float32), w.astype(jnp.float32),
                   precision=lax.Precision.HIGHEST) + b.astype(jnp.float32)
    return y.reshape(N, H * W * num_anchors, 10)


if __name__ == "__main__":
    key = jax.random.PRNGKey(0)

    # (name, N, Cin, H, W, num_anchors, dtype, tile_hw) — small shapes covering
    # the lane-dense single-tile, ragged non-128 level, and lane-dense
    # multi-tile (ragged trailing block) paths.
    cases = [
        ("lane_dense_single_tile", 2, 64, 16, 16, 3, jnp.bfloat16, 2048),
        ("ragged_non128_level",    1, 32, 20, 20, 3, jnp.float32,  2048),
        ("lane_dense_multi_tile",  1, 64, 40, 40, 3, jnp.bfloat16, 512),
    ]
    for name, N, Cin, H, W, A, dtype, tile_hw in cases:
        key, kx, kw, kb = jax.random.split(key, 4)
        bound = 1.0 / (Cin ** 0.5)
        x = jax.random.normal(kx, (N, Cin, H, W), jnp.float32).astype(dtype)
        # PyTorch weight is (Cout, Cin, 1, 1); the kernel takes it as (Cin, Cout).
        w = jax.random.uniform(kw, (Cin, A * 10), jnp.float32,
                               -bound, bound).astype(dtype)
        b = jax.random.uniform(kb, (A * 10,), jnp.float32, -bound, bound)

        out = landmark_head_forward(x, w, b, A, tile_hw=tile_hw)
        out = jax.block_until_ready(out)
        ref = _reference(x, w, b, A)

        assert out.shape == (N, H * W * A, 10), (name, out.shape)
        assert jnp.allclose(out.astype(jnp.float32), ref, atol=2e-2, rtol=2e-2), \
            f"mismatch vs reference in case {name}"

    print("KERNEL_OK")
</pallas_src>

<mosaic_0001>
module attributes {stable_mosaic.version = 11 : i64} {
  func.func @_landmark_head_kernel(%arg0: i32, %arg1: i32, %arg2: memref<1x64x256xbf16, #tpu.memory_space<vmem>>, %arg3: memref<64x30xbf16, #tpu.memory_space<vmem>>, %arg4: memref<1x30xf32, #tpu.memory_space<vmem>>, %arg5: memref<1x60x128xbf16, #tpu.memory_space<vmem>>) attributes {dimension_semantics = [#tpu.dimension_semantics<parallel>, #tpu.dimension_semantics<parallel>], iteration_bounds = array<i64: 2, 1>, scalar_prefetch = 0 : i64, scratch_operands = 0 : i64, tpu.core_type = #tpu.core_type<tc>, window_params = [{transform_indices = @transform_0, window_bounds = array<i64: 1, 64, 256>}, {pipeline_mode = #tpu.pipeline_mode<synchronous>, transform_indices = @transform_1, window_bounds = array<i64: 64, 30>}, {pipeline_mode = #tpu.pipeline_mode<synchronous>, transform_indices = @transform_2, window_bounds = array<i64: 1, 30>}, {transform_indices = @transform_3, window_bounds = array<i64: 1, 60, 128>}]} {
    %c0 = arith.constant 0 : index
    %c0_0 = arith.constant 0 : index
    %c0_1 = arith.constant 0 : index
    %0 = vector.load %arg2[%c0, %c0_0, %c0_1] : memref<1x64x256xbf16, #tpu.memory_space<vmem>>, vector<1x64x256xbf16>
    %1 = vector.shape_cast %0 : vector<1x64x256xbf16> to vector<64x256xbf16>
    %c0_2 = arith.constant 0 : index
    %c0_3 = arith.constant 0 : index
    %2 = vector.load %arg3[%c0_2, %c0_3] : memref<64x30xbf16, #tpu.memory_space<vmem>>, vector<64x30xbf16>
    %cst = arith.constant dense<0.000000e+00> : vector<256x30xf32>
    %3 = tpu.matmul %1, %2, %cst {dimension_numbers = #tpu.dot_dimension_numbers<[0], [0], [1], [1], [0, 1, 1, 1], [], []>} : vector<64x256xbf16>, vector<64x30xbf16>, vector<256x30xf32> -> vector<256x30xf32>
    %c0_4 = arith.constant 0 : index
    %c0_5 = arith.constant 0 : index
    %4 = vector.load %arg4[%c0_4, %c0_5] : memref<1x30xf32, #tpu.memory_space<vmem>>, vector<1x30xf32>
    %5 = vector.broadcast %4 : vector<1x30xf32> to vector<256x30xf32>
    %6 = arith.addf %3, %5 : vector<256x30xf32>
    %7 = arith.truncf %6 : vector<256x30xf32> to vector<256x30xbf16>
    %8 = vector.shape_cast %7 : vector<256x30xbf16> to vector<60x128xbf16>
    %c0_6 = arith.constant 0 : index
    %c0_7 = arith.constant 0 : index
    %c0_8 = arith.constant 0 : index
    %9 = vector.load %arg5[%c0_6, %c0_7, %c0_8] : memref<1x60x128xbf16, #tpu.memory_space<vmem>>, vector<1x60x128xbf16>
    %10 = vector.shape_cast %9 : vector<1x60x128xbf16> to vector<60x128xbf16>
    %11 = vector.shape_cast %8 : vector<60x128xbf16> to vector<1x60x128xbf16>
    tpu.vector_store %arg5[%c0_6, %c0_7, %c0_8], %11 {strides = array<i32>} : memref<1x60x128xbf16, #tpu.memory_space<vmem>>, vector<1x60x128xbf16>,
    return
  }
  func.func @transform_0(%arg0: i32, %arg1: i32) -> (i32, i32, i32) {
    %c0_i32 = arith.constant 0 : i32
    %c0_i32_0 = arith.constant 0 : i32
    return %arg0, %c0_i32, %arg1 : i32, i32, i32
  }
  func.func @transform_1(%arg0: i32, %arg1: i32) -> (i32, i32) {
    %c0_i32 = arith.constant 0 : i32
    %c0_i32_0 = arith.constant 0 : i32
    %c0_i32_1 = arith.constant 0 : i32
    return %c0_i32, %c0_i32_0 : i32, i32
  }
  func.func @transform_2(%arg0: i32, %arg1: i32) -> (i32, i32) {
    %c0_i32 = arith.constant 0 : i32
    %c0_i32_0 = arith.constant 0 : i32
    %c0_i32_1 = arith.constant 0 : i32
    return %c0_i32, %c0_i32_0 : i32, i32
  }
  func.func @transform_3(%arg0: i32, %arg1: i32) -> (i32, i32, i32) {
    %c0_i32 = arith.constant 0 : i32
    %c0_i32_0 = arith.constant 0 : i32
    return %arg0, %arg1, %c0_i32 : i32, i32, i32
  }
}

module attributes {stable_mosaic.version = 11 : i64} {
  func.func @_landmark_head_kernel(%arg0: i32, %arg1: i32, %arg2: memref<1x64x256xbf16, #tpu.memory_space<vmem>>, %arg3: memref<64x30xbf16, #tpu.memory_space<vmem>>, %arg4: memref<1x30xf32, #tpu.memory_space<vmem>>, %arg5: memref<1x256x30xbf16, #tpu.memory_space<vmem>>) attributes {dimension_semantics = [#tpu.dimension_semantics<parallel>, #tpu.dimension_semantics<parallel>], iteration_bounds = array<i64: 2, 1>, scalar_prefetch = 0 : i64, scratch_operands = 0 : i64, tpu.core_type = #tpu.core_type<tc>, window_params = [{transform_indices = @transform_0, window_bounds = array<i64: 1, 64, 256>}, {pipeline_mode = #tpu.pipeline_mode<synchronous>, transform_indices = @transform_1, window_bounds = array<i64: 64, 30>}, {pipeline_mode = #tpu.pipeline_mode<synchronous>, transform_indices = @transform_2, window_bounds = array<i64: 1, 30>}, {transform_indices = @transform_3, window_bounds = array<i64: 1, 256, 30>}]} {
    %c0 = arith.constant 0 : index
    %c0_0 = arith.constant 0 : index
    %c0_1 = arith.constant 0 : index
    %0 = vector.load %arg2[%c0, %c0_0, %c0_1] : memref<1x64x256xbf16, #tpu.memory_space<vmem>>, vector<1x64x256xbf16>
    %1 = vector.shape_cast %0 : vector<1x64x256xbf16> to vector<64x256xbf16>
    %c0_2 = arith.constant 0 : index
    %c0_3 = arith.constant 0 : index
    %2 = vector.load %arg3[%c0_2, %c0_3] : memref<64x30xbf16, #tpu.memory_space<vmem>>, vector<64x30xbf16>
    %cst = arith.constant dense<0.000000e+00> : vector<256x30xf32>
    %3 = tpu.matmul %1, %2, %cst {dimension_numbers = #tpu.dot_dimension_numbers<[0], [0], [1], [1], [0, 1, 1, 1], [], []>} : vector<64x256xbf16>, vector<64x30xbf16>, vector<256x30xf32> -> vector<256x30xf32>
    %c0_4 = arith.constant 0 : index
    %c0_5 = arith.constant 0 : index
    %4 = vector.load %arg4[%c0_4, %c0_5] : memref<1x30xf32, #tpu.memory_space<vmem>>, vector<1x30xf32>
    %5 = vector.broadcast %4 : vector<1x30xf32> to vector<256x30xf32>
    %6 = arith.addf %3, %5 : vector<256x30xf32>
    %7 = arith.truncf %6 : vector<256x30xf32> to vector<256x30xbf16>
    %c0_6 = arith.constant 0 : index
    %c0_7 = arith.constant 0 : index
    %c0_8 = arith.constant 0 : index
    %8 = vector.load %arg5[%c0_6, %c0_7, %c0_8] : memref<1x256x30xbf16, #tpu.memory_space<vmem>>, vector<1x256x30xbf16>
    %9 = vector.shape_cast %8 : vector<1x256x30xbf16> to vector<256x30xbf16>
    %10 = vector.shape_cast %7 : vector<256x30xbf16> to vector<1x256x30xbf16>
    tpu.vector_store %arg5[%c0_6, %c0_7, %c0_8], %10 {strides = array<i32>} : memref<1x256x30xbf16, #tpu.memory_space<vmem>>, vector<1x256x30xbf16>,
    return
  }
  func.func @transform_0(%arg0: i32, %arg1: i32) -> (i32, i32, i32) {
    %c0_i32 = arith.constant 0 : i32
    %c0_i32_0 = arith.constant 0 : i32
    return %arg0, %c0_i32, %arg1 : i32, i32, i32
  }
  func.func @transform_1(%arg0: i32, %arg1: i32) -> (i32, i32) {
    %c0_i32 = arith.constant 0 : i32
    %c0_i32_0 = arith.constant 0 : i32
    %c0_i32_1 = arith.constant 0 : i32
    return %c0_i32, %c0_i32_0 : i32, i32
  }
  func.func @transform_2(%arg0: i32, %arg1: i32) -> (i32, i32) {
    %c0_i32 = arith.constant 0 : i32
    %c0_i32_0 = arith.constant 0 : i32
    %c0_i32_1 = arith.constant 0 : i32
    return %c0_i32, %c0_i32_0 : i32, i32
  }
  func.func @transform_3(%arg0: i32, %arg1: i32) -> (i32, i32, i32) {
    %c0_i32 = arith.constant 0 : i32
    %c0_i32_0 = arith.constant 0 : i32
    return %arg0, %arg1, %c0_i32 : i32, i32, i32
  }
}

</mosaic_0001>

<llo_original>
// kernel: tpu_custom_call.1
$region0: #{tpu_custom_call.1}
  #allocation0 [shape = 'u32[]', space=smem, size = 0x4, offset = 0x4, fixed_abs, tag = 'smem constant byte address 0x4 - core index']
  #allocation1 [shape = 'u32[144,128]{1,0:T(1,128)}', space=vmem, size = 0x12000, scoped, tag = 'internal scratch']
  %s0 = inlined_call_operand.hbm [shape: bf16[2,64,256], index: 0, kind: input, shape index: {}]
  %s1 = inlined_call_operand.vmem [shape: bf16[64,30], index: 1, kind: input, shape index: {}]
  %s2 = inlined_call_operand.vmem [shape: f32[1,30], index: 2, kind: input, shape index: {}]
  %s3 = inlined_call_operand.vmem [shape: bf16[2,256,30], index: 3, kind: output, shape index: {}]
  %s4 = sld [smem:[#allocation0]]
  $region49: #{tpu_custom_call.1} parent=0
    _
  %s6 = ssub.s32 1, %s4
  %s7 = scalar_select 0, %s6, %s4
  $region1: #{tpu_custom_call.1} parent=0
    #allocation2 [shape = 'u8[65536]{0}', space=vmem, size = 0x10000, scoped, tag = 'input window, operand 0']
    #allocation3 [shape = 's32[2]{0}', space=sflag, size = 0x8, scoped, tag = 'scoped memory for tpu_custom_call.1']
    %8 = vsyncpa [#allocation3], 0
    %s9 = scalar_lea.sflag [#allocation3], 1
    %10 = vsyncpa %s9, 0
    loop: start=0, step=1, limit=4
    $region2: #{tpu_custom_call.1} parent=1 // loop_pre_header
      _
    $region3: #{tpu_custom_call.1} parent=1 // loop_header
      %s12 = sphi 0, %s16
      %p13 = scmp.ge.s32.totalorder %s12, 4
      %s19 = sphi 0, %s31
      %s20 = sphi 0, %s27
      %s21 = sphi 0, %s19
      %s22 = sphi 0, %s20
      %s23 = sphi 0, %s21
      %s24 = sphi 0, %s22
      %s36 = sphi 0, %s38
      %s39 = sphi 0, %s36
      %s40 = sphi 0, %s39
      %s56 = sphi 0, %s40
      %s60 = sphi 0, %s60
      %s62 = sphi 0, %s60
      %s63 = sphi 0, %s62
      %s77 = sphi 0, %s63
      %s81 = sphi 0, %s81
      %s83 = sphi 0, %s81
      %s84 = sphi 0, %s83
      %s98 = sphi 0, %s84
      %s106 = sphi 0, %s108
      %s109 = sphi 0, %s106
      %s110 = sphi 0, %s109
      %s126 = sphi 0, %s110
    $region4: #{tpu_custom_call.1} parent=1 // loop_header_branch
      %15 = sbr.rel (%p13) target = $region8
    $region5: #{tpu_custom_call.1} parent=1 // loop_body
      %s17 = ssub.s32 %s12, 1
      %s18 = ssub.s32 %s12, 2
      %s25 = sadd.s32 1, %s20
      %p26 = scmp.ge.s32.totalorder %s25, 1
      %s27 = scalar_select %p26, 0, %s25
      %s28 = sadd.s32 1, %s19
      %s29 = scalar_select %p26, %s28, %s19
      %p30 = scmp.ge.s32.totalorder %s29, 2
      %s31 = scalar_select %p30, 0, %s29
      %s32 = ssub.s32 %s19, %s31
      %s33 = ssub.s32 %s20, %s27
      %s34 = sor.u32 %s32, %s33
      %p35 = scmp.eq.s32.totalorder %s34, 0
      %s37 = sadd.s32 %s36, 1
      %s38 = scalar_select %p35, %s36, %s37
      %p41 = pneg %p35
      %p42 = scmp.eq.s32.totalorder %s12, 1
      %p43 = por %p41, %p42
      %p44 = scmp.ne.s32.totalorder %s36, %s39
      %p45 = scmp.eq.s32.totalorder %s12, 0
      %p46 = por %p44, %p45
      %p47 = scmp.ne.s32.totalorder %s36, %s39
      %p48 = scmp.eq.s32.totalorder %s17, 1
      %p49 = por %p47, %p48
      %p50 = scmp.ne.s32.totalorder %s39, %s40
      %p51 = scmp.eq.s32.totalorder %s17, 0
      %p52 = por %p50, %p51
      %p53 = scmp.ne.s32.totalorder %s39, %s40
      %p54 = scmp.eq.s32.totalorder %s18, 1
      %p55 = por %p53, %p54
      %p57 = scmp.ne.s32.totalorder %s40, %s56
      %p58 = scmp.eq.s32.totalorder %s18, 0
      %p59 = por %p57, %p58
      %s61 = sadd.s32 %s60, 1
      %p64 = scmp.eq.s32.totalorder %s12, 1
      %p65 = scmp.ne.s32.totalorder %s60, %s62
      %p66 = scmp.eq.s32.totalorder %s12, 0
      %p67 = por %p65, %p66
      %p68 = scmp.ne.s32.totalorder %s60, %s62
      %p69 = scmp.eq.s32.totalorder %s17, 1
      %p70 = por %p68, %p69
      %p71 = scmp.ne.s32.totalorder %s62, %s63
      %p72 = scmp.eq.s32.totalorder %s17, 0
      %p73 = por %p71, %p72
      %p74 = scmp.ne.s32.totalorder %s62, %s63
      %p75 = scmp.eq.s32.totalorder %s18, 1
      %p76 = por %p74, %p75
      %p78 = scmp.ne.s32.totalorder %s63, %s77
      %p79 = scmp.eq.s32.totalorder %s18, 0
      %p80 = por %p78, %p79
      %s82 = sadd.s32 %s81, 1
      %p85 = scmp.eq.s32.totalorder %s12, 1
      %p86 = scmp.ne.s32.totalorder %s81, %s83
      %p87 = scmp.eq.s32.totalorder %s12, 0
      %p88 = por %p86, %p87
      %p89 = scmp.ne.s32.totalorder %s81, %s83
      %p90 = scmp.eq.s32.totalorder %s17, 1
      %p91 = por %p89, %p90
      %p92 = scmp.ne.s32.totalorder %s83, %s84
      %p93 = scmp.eq.s32.totalorder %s17, 0
      %p94 = por %p92, %p93
      %p95 = scmp.ne.s32.totalorder %s83, %s84
      %p96 = scmp.eq.s32.totalorder %s18, 1
      %p97 = por %p95, %p96
      %p99 = scmp.ne.s32.totalorder %s84, %s98
      %p100 = scmp.eq.s32.totalorder %s18, 0
      %p101 = por %p99, %p100
      %s102 = ssub.s32 %s19, %s31
      %s103 = ssub.s32 %s20, %s27
      %s104 = sor.u32 %s102, %s103
      %p105 = scmp.eq.s32.totalorder %s104, 0
      %s107 = sadd.s32 %s106, 1
      %s108 = scalar_select %p105, %s106, %s107
      %p111 = pneg %p105
      %p112 = scmp.eq.s32.totalorder %s12, 1
      %p113 = por %p111, %p112
      %p114 = scmp.ne.s32.totalorder %s106, %s109
      %p115 = scmp.eq.s32.totalorder %s12, 0
      %p116 = por %p114, %p115
      %p117 = scmp.ne.s32.totalorder %s106, %s109
      %p118 = scmp.eq.s32.totalorder %s17, 1
      %p119 = por %p117, %p118
      %p120 = scmp.ne.s32.totalorder %s109, %s110
      %p121 = scmp.eq.s32.totalorder %s17, 0
      %p122 = por %p120, %p121
      %p123 = scmp.ne.s32.totalorder %s109, %s110
      %p124 = scmp.eq.s32.totalorder %s18, 1
      %p125 = por %p123, %p124
      %p127 = scmp.ne.s32.totalorder %s110, %s126
      %p128 = scmp.eq.s32.totalorder %s18, 0
      %p129 = por %p127, %p128
      %p130 = scmp.le.s32.totalorder 1, %s12
      %p131 = scmp.lt.s32.totalorder %s12, 3
      %p132 = pnand %p130, %p131
      %p133 = pneg %p132
      // Predicated region
      $region9: #{tpu_custom_call.1} parent=5 // pred_check
        _
      $region10: #{tpu_custom_call.1} parent=5 // pred_check_branch
        %135 = sbr.rel (%p132) target = $region12
      $region11: #{tpu_custom_call.1} parent=5 // pred_region
        %s136 = ssub.s32 %s12, 1
        // Predicated region
        $region13: #{tpu_custom_call.1} parent=11 // pred_check
          %p137 = pneg %p73
        $region14: #{tpu_custom_call.1} parent=11 // pred_check_branch
          %139 = sbr.rel (%p137) target = $region16
        $region15: #{tpu_custom_call.1} parent=11 // pred_region
          _
        $region16: #{tpu_custom_call.1} parent=11 // pred_fallthru
          _
        // Predicated region
        $region17: #{tpu_custom_call.1} parent=11 // pred_check
          %p140 = pneg %p94
        $region18: #{tpu_custom_call.1} parent=11 // pred_check_branch
          %142 = sbr.rel (%p140) target = $region20
        $region19: #{tpu_custom_call.1} parent=11 // pred_region
          _
        $region20: #{tpu_custom_call.1} parent=11 // pred_fallthru
          _
      $region12: #{tpu_custom_call.1} parent=5 // pred_fallthru
        _
      %p143 = scmp.lt.s32.totalorder %s12, 2
      // Predicated region
      $region21: #{tpu_custom_call.1} parent=5 // pred_check
        %p144 = pneg %p143
      $region22: #{tpu_custom_call.1} parent=5 // pred_check_branch
        %146 = sbr.rel (%p144) target = $region24
      $region23: #{tpu_custom_call.1} parent=5 // pred_region
        // Predicated region
        $region25: #{tpu_custom_call.1} parent=23 // pred_check
          %p147 = pneg %p46
        $region26: #{tpu_custom_call.1} parent=23 // pred_check_branch
          %149 = sbr.rel (%p147) target = $region28
        $region27: #{tpu_custom_call.1} parent=23 // pred_region
          %s150 = sand.u32 %s36, 1
          %s151 = scalar_lea.sflag [#allocation3], %s150
          %s152 = sand.u32 %s36, 1
          %s153 = smul.addr %s152, 64
          %s154 = scalar_lea.vmem [#allocation2], %s153
          %s155 = smul.u32 2, %s20
          %s157 = ssub.s32 1024, 1024
          %158 = vsyncadd %s151, %s157
          %s159 = smul.addr %s19, 16
          %s160 = sadd.s32 %s155, %s159
          %s161 = smul.addr %s160, 64
          %s162 = scalar_lea.hbm %s0, %s161
          %s163 = sshll.u32 %s154, 4
          %s164 = int_to_ptr.vmem [resolvable:$true] %s163
          %169 = dma.hbm_to_vmem [thread:$0]  %s162, 1024, %s164, %s151, 128, 128, 8
        $region28: #{tpu_custom_call.1} parent=23 // pred_fallthru
          _
      $region24: #{tpu_custom_call.1} parent=5 // pred_fallthru
        _
      %p170 = scmp.le.s32.totalorder 1, %s12
      %p171 = scmp.lt.s32.totalorder %s12, 3
      %p172 = pnand %p170, %p171
      %p173 = pneg %p172
      // Predicated region
      $region29: #{tpu_custom_call.1} parent=5 // pred_check
        _
      $region30: #{tpu_custom_call.1} parent=5 // pred_check_branch
        %175 = sbr.rel (%p172) target = $region32
      $region31: #{tpu_custom_call.1} parent=5 // pred_region
        %s176 = ssub.s32 %s12, 1
        %s177 = sand.u32 %s39, 1
        %s178 = scalar_lea.sflag [#allocation3], %s177
        %s179 = sand.u32 %s39, 1
        %s180 = smul.addr %s179, 64
        %s181 = scalar_lea.vmem [#allocation2], %s180
        // Predicated region
        $region33: #{tpu_custom_call.1} parent=31 // pred_check
          %p182 = pneg %p52
        $region34: #{tpu_custom_call.1} parent=31 // pred_check_branch
          %184 = sbr.rel (%p182) target = $region36
        $region35: #{tpu_custom_call.1} parent=31 // pred_region
          %185 = dma.done %s178, 1024
        $region36: #{tpu_custom_call.1} parent=31 // pred_fallthru
          _
        %s186 = sand.u32 %s39, 1
        %s187 = scalar_lea.sflag [#allocation3], %s186
        %s188 = sand.u32 %s39, 1
        %s189 = smul.addr %s188, 64
        %s190 = scalar_lea.vmem [#allocation2], %s189
        %p191 = pneg %p52
        %p192 = pneg %p49
        %p193 = pneg %p73
        %p194 = pneg %p70
        %p195 = pneg %p94
        %p196 = pneg %p91
        %p197 = pneg %p122
        %p198 = pneg %p119
        %s199 = smul.u32 32, %s22
        %p200 = scmp.lt.s32.totalorder %s21, 1
        %s201 = scalar_select %p200, %s21, 1
        %p202 = scmp.lt.s32.totalorder %s199, 31
        %s203 = scalar_select %p202, %s199, 31
        %s204 = smul.addr %s201, 32
        %s205 = sadd.s32 %s203, %s204
        %s206 = smul.addr %s205, 4
        %s207 = scalar_lea.vmem %s3, %s206
        %s208 = smul.u32 2, %s22
        %s209 = smul.u32 32, %s22
        %p210 = scmp.lt.s32.totalorder %s21, 1
        %s211 = scalar_select %p210, %s21, 1
        %p212 = scmp.lt.s32.totalorder %s209, 31
        %s213 = scalar_select %p212, %s209, 31
        %s214 = smul.addr %s211, 32
        %s215 = sadd.s32 %s213, %s214
        %s216 = smul.addr %s215, 4
        %s217 = scalar_lea.vmem %s3, %s216
        %s218 = smul.u32 32, %s22
        %v220 = vld [vmem:[%s181] sm:$0xff]
        %v221 = vld [vmem:[%s181 + $0x8] sm:$0xff]
        %v222 = vld [vmem:[%s181 + $0x10] sm:$0xff]
        %v223 = vld [vmem:[%s181 + $0x18] sm:$0xff]
        %v224 = vld [vmem:[%s181 + $0x20] sm:$0xff]
        %v225 = vld [vmem:[%s181 + $0x28] sm:$0xff]
        %v226 = vld [vmem:[%s181 + $0x30] sm:$0xff]
        %v227 = vld [vmem:[%s181 + $0x38] sm:$0xff]
        %v228 = vld [vmem:[%s1] sm:$0xf]
        %v229 = vld [vmem:[%s1 + $0x4] sm:$0xf]
        %v230 = vld [vmem:[%s1 + $0x8] sm:$0xf]
        %v231 = vld [vmem:[%s1 + $0xc] sm:$0xf]
        %v232 = vld [vmem:[%s1 + $0x10] sm:$0xf]
        %v233 = vld [vmem:[%s1 + $0x14] sm:$0xf]
        %v234 = vld [vmem:[%s1 + $0x18] sm:$0xf]
        %v235 = vld [vmem:[%s1 + $0x1c] sm:$0xf]
        %v236 = vld [vmem:[%s2] sm:$0x1]
        %v238 = vlaneseq
        %v239 = vshrl.u32 %v238, 7
        %v240 = vsub.s32 0, %v239
        %v241 = vrot.slane %v236, %v240
        %v251 = vunpack.c.l.b16 %v220
        %v252 = vunpack.c.h.b16 %v220
        %v253 = vunpack.c.l.b16 %v221
        %v254 = vunpack.c.h.b16 %v221
        %v255 = vunpack.c.l.b16 %v222
        %v256 = vunpack.c.h.b16 %v222
        %v257 = vunpack.c.l.b16 %v223
        %v258 = vunpack.c.h.b16 %v223
        %v259 = vunpack.c.l.b16 %v224
        %v260 = vunpack.c.h.b16 %v224
        %v261 = vunpack.c.l.b16 %v225
        %v262 = vunpack.c.h.b16 %v225
        %v263 = vunpack.c.l.b16 %v226
        %v264 = vunpack.c.h.b16 %v226
        %v265 = vunpack.c.l.b16 %v227
        %v266 = vunpack.c.h.b16 %v227
        %v267 = vpack.c.b16 %v253, %v251
        %v268 = vpack.c.b16 %v254, %v252
        %v269 = vpack.c.b16 %v257, %v255
        %v270 = vpack.c.b16 %v258, %v256
        %v271 = vpack.c.b16 %v261, %v259
        %v272 = vpack.c.b16 %v262, %v260
        %v273 = vpack.c.b16 %v265, %v263
        %v274 = vpack.c.b16 %v266, %v264
        %283 = vxpose.xlu0.c.b16.start [1/8] %v267, 128
        %284 = vxpose.xlu0.c.b16.cont [2/8] %v269, 128
        %285 = vxpose.xlu0.c.b16.cont [3/8] %v271, 128
        %286 = vxpose.xlu0.c.b16.cont [4/8] %v273, 128
        %287 = vxpose.xlu0.c.b16.cont [5/8] 0, 128
        %288 = vxpose.xlu0.c.b16.cont [6/8] 0, 128
        %289 = vxpose.xlu0.c.b16.cont [7/8] 0, 128
        %290 = vxpose.xlu0.c.b16.end [8/8] 0, 128
        %v291 = vpop.trf.xlu0
        %v292 = vpop.trf.xlu0
        %v293 = vpop.trf.xlu0
        %v294 = vpop.trf.xlu0
        %v295 = vpop.trf.xlu0
        %v296 = vpop.trf.xlu0
        %v297 = vpop.trf.xlu0
        %v298 = vpop.trf.xlu0
        %299 = vxpose.xlu0.c.b16.start [1/8] %v268, 128
        %300 = vxpose.xlu0.c.b16.cont [2/8] %v270, 128
        %301 = vxpose.xlu0.c.b16.cont [3/8] %v272, 128
        %302 = vxpose.xlu0.c.b16.cont [4/8] %v274, 128
        %303 = vxpose.xlu0.c.b16.cont [5/8] 0, 128
        %304 = vxpose.xlu0.c.b16.cont [6/8] 0, 128
        %305 = vxpose.xlu0.c.b16.cont [7/8] 0, 128
        %306 = vxpose.xlu0.c.b16.end [8/8] 0, 128
        %v307 = vpop.trf.xlu0
        %v308 = vpop.trf.xlu0
        %v309 = vpop.trf.xlu0
        %v310 = vpop.trf.xlu0
        %v311 = vpop.trf.xlu0
        %v312 = vpop.trf.xlu0
        %v313 = vpop.trf.xlu0
        %v314 = vpop.trf.xlu0
        %v323 = vunpack.c.l.b16 %v228
        %v324 = vunpack.c.l.b16 %v229
        %v325 = vunpack.c.l.b16 %v230
        %v326 = vunpack.c.l.b16 %v231
        %v327 = vunpack.c.l.b16 %v232
        %v328 = vunpack.c.l.b16 %v233
        %v329 = vunpack.c.l.b16 %v234
        %v330 = vunpack.c.l.b16 %v235
        %v331 = vpack.c.b16 %v324, %v323
        %v332 = vpack.c.b16 %v326, %v325
        %v333 = vpack.c.b16 %v328, %v327
        %v334 = vpack.c.b16 %v330, %v329
        %vm339 = vcmask 523264
        %v341 = vsel %vm339, %v291, 0
        %v344 = vsel %vm339, %v292, 0
        %v347 = vsel %vm339, %v293, 0
        %v350 = vsel %vm339, %v294, 0
        %v353 = vsel %vm339, %v295, 0
        %v356 = vsel %vm339, %v296, 0
        %v359 = vsel %vm339, %v297, 0
        %v362 = vsel %vm339, %v298, 0
        %v365 = vsel %vm339, %v307, 0
        %v368 = vsel %vm339, %v308, 0
        %v371 = vsel %vm339, %v309, 0
        %v374 = vsel %vm339, %v310, 0
        %v377 = vsel %vm339, %v311, 0
        %v380 = vsel %vm339, %v312, 0
        %v383 = vsel %vm339, %v313, 0
        %v386 = vsel %vm339, %v314, 0
        %388 = vmatprep.subr.bf16.mxu0 0
        %389 = vmatpush1.bf16.msra.mxu0 0
        %390 = vmatprep.subr.bf16.mxu0 0
        %391 = vmatpush1.bf16.msra.mxu0 0
        %392 = vmatprep.subr.bf16.mxu0 0
        %393 = vmatpush1.bf16.msra.mxu0 0
        %394 = vmatprep.subr.bf16.mxu0 0
        %395 = vmatpush1.bf16.msra.mxu0 0
        %396 = vmatprep.subr.bf16.mxu0 0
        %397 = vmatpush1.bf16.msra.mxu0 %v334
        %398 = vmatprep.subr.bf16.mxu0 0
        %399 = vmatpush1.bf16.msra.mxu0 %v333
        %400 = vmatprep.subr.bf16.mxu0 0
        %401 = vmatpush1.bf16.msra.mxu0 %v332
        %402 = vmatprep.subr.bf16.mxu0 0
        %403 = vmatpush1.bf16.msra.mxu0 %v331
        %404 = vmatprep.subr.bf16.mxu0 0
        %405 = vmatpush2.bf16.msra.mxu0 0
        %406 = vmatprep.subr.bf16.mxu0 0
        %407 = vmatpush2.bf16.msra.mxu0 0
        %408 = vmatprep.subr.bf16.mxu0 0
        %409 = vmatpush2.bf16.msra.mxu0 0
        %410 = vmatprep.subr.bf16.mxu0 0
        %411 = vmatpush2.bf16.msra.mxu0 0
        %412 = vmatprep.subr.bf16.mxu0 0
        %413 = vmatpush2.bf16.msra.mxu0 0
        %414 = vmatprep.subr.bf16.mxu0 0
        %415 = vmatpush2.bf16.msra.mxu0 0
        %416 = vmatprep.subr.bf16.mxu0 0
        %417 = vmatpush2.bf16.msra.mxu0 0
        %418 = vmatprep.subr.bf16.mxu0 0
        %419 = vmatpush2.bf16.msra.mxu0 0
        %420 = vmatprep.mubr.bf16.mxu0 0
        %421 = vmatmul.mubr.bf16.gmra.mxu0 %v341
        %v422 = vpop.f32.mrf.mxu0
        %v423 = vadd.f32 %v241, %v422
        %v424 = vpop.f32.mrf.mxu0
        %v425 = vpop.f32.mrf.mxu0
        %v426 = vadd.f32 %v241, %v425
        %v427 = vpop.f32.mrf.mxu0
        %428 = vmatprep.mubr.bf16.mxu0 0
        %429 = vmatmul.mubr.bf16.gmra.mxu0 %v344
        %v430 = vpop.f32.mrf.mxu0
        %v431 = vadd.f32 %v241, %v430
        %v432 = vpop.f32.mrf.mxu0
        %v433 = vpop.f32.mrf.mxu0
        %v434 = vadd.f32 %v241, %v433
        %v435 = vpop.f32.mrf.mxu0
        %436 = vmatprep.mubr.bf16.mxu0 0
        %437 = vmatmul.mubr.bf16.gmra.mxu0 %v347
        %v438 = vpop.f32.mrf.mxu0
        %v439 = vadd.f32 %v241, %v438
        %v440 = vpop.f32.mrf.mxu0
        %v441 = vpop.f32.mrf.mxu0
        %v442 = vadd.f32 %v241, %v441
        %v443 = vpop.f32.mrf.mxu0
        %444 = vmatprep.mubr.bf16.mxu0 0
        %445 = vmatmul.mubr.bf16.gmra.mxu0 %v350
        %v446 = vpop.f32.mrf.mxu0
        %v447 = vadd.f32 %v241, %v446
        %v448 = vpop.f32.mrf.mxu0
        %v449 = vpop.f32.mrf.mxu0
        %v450 = vadd.f32 %v241, %v449
        %v451 = vpop.f32.mrf.mxu0
        %452 = vmatprep.mubr.bf16.mxu0 0
        %453 = vmatmul.mubr.bf16.gmra.mxu0 %v353
        %v454 = vpop.f32.mrf.mxu0
        %v455 = vadd.f32 %v241, %v454
        %v456 = vpop.f32.mrf.mxu0
        %v457 = vpop.f32.mrf.mxu0
        %v458 = vadd.f32 %v241, %v457
        %v459 = vpop.f32.mrf.mxu0
        %460 = vmatprep.mubr.bf16.mxu0 0
        %461 = vmatmul.mubr.bf16.gmra.mxu0 %v356
        %v462 = vpop.f32.mrf.mxu0
        %v463 = vadd.f32 %v241, %v462
        %v464 = vpop.f32.mrf.mxu0
        %v465 = vpop.f32.mrf.mxu0
        %v466 = vadd.f32 %v241, %v465
        %v467 = vpop.f32.mrf.mxu0
        %468 = vmatprep.mubr.bf16.mxu0 0
        %469 = vmatmul.mubr.bf16.gmra.mxu0 %v359
        %v470 = vpop.f32.mrf.mxu0
        %v471 = vadd.f32 %v241, %v470
        %v472 = vpop.f32.mrf.mxu0
        %v473 = vpop.f32.mrf.mxu0
        %v474 = vadd.f32 %v241, %v473
        %v475 = vpop.f32.mrf.mxu0
        %476 = vmatprep.mubr.bf16.mxu0 0
        %477 = vmatmul.mubr.bf16.gmra.mxu0 %v362
        %v478 = vpop.f32.mrf.mxu0
        %v479 = vadd.f32 %v241, %v478
        %v480 = vpop.f32.mrf.mxu0
        %v481 = vpop.f32.mrf.mxu0
        %v482 = vadd.f32 %v241, %v481
        %v483 = vpop.f32.mrf.mxu0
        %484 = vmatprep.mubr.bf16.mxu0 0
        %485 = vmatmul.mubr.bf16.gmra.mxu0 %v365
        %v486 = vpop.f32.mrf.mxu0
        %v487 = vadd.f32 %v241, %v486
        %v488 = vpop.f32.mrf.mxu0
        %v489 = vpop.f32.mrf.mxu0
        %v490 = vadd.f32 %v241, %v489
        %v491 = vpop.f32.mrf.mxu0
        %492 = vmatprep.mubr.bf16.mxu0 0
        %493 = vmatmul.mubr.bf16.gmra.mxu0 %v368
        %v494 = vpop.f32.mrf.mxu0
        %v495 = vadd.f32 %v241, %v494
        %v496 = vpop.f32.mrf.mxu0
        %v497 = vpop.f32.mrf.mxu0
        %v498 = vadd.f32 %v241, %v497
        %v499 = vpop.f32.mrf.mxu0
        %500 = vmatprep.mubr.bf16.mxu0 0
        %501 = vmatmul.mubr.bf16.gmra.mxu0 %v371
        %v502 = vpop.f32.mrf.mxu0
        %v503 = vadd.f32 %v241, %v502
        %v504 = vpop.f32.mrf.mxu0
        %v505 = vpop.f32.mrf.mxu0
        %v506 = vadd.f32 %v241, %v505
        %v507 = vpop.f32.mrf.mxu0
        %508 = vmatprep.mubr.bf16.mxu0 0
        %509 = vmatmul.mubr.bf16.gmra.mxu0 %v374
        %v510 = vpop.f32.mrf.mxu0
        %v511 = vadd.f32 %v241, %v510
        %v512 = vpop.f32.mrf.mxu0
        %v513 = vpop.f32.mrf.mxu0
        %v514 = vadd.f32 %v241, %v513
        %v515 = vpop.f32.mrf.mxu0
        %516 = vmatprep.mubr.bf16.mxu0 0
        %517 = vmatmul.mubr.bf16.gmra.mxu0 %v377
        %v518 = vpop.f32.mrf.mxu0
        %v519 = vadd.f32 %v241, %v518
        %v520 = vpop.f32.mrf.mxu0
        %v521 = vpop.f32.mrf.mxu0
        %v522 = vadd.f32 %v241, %v521
        %v523 = vpop.f32.mrf.mxu0
        %524 = vmatprep.mubr.bf16.mxu0 0
        %525 = vmatmul.mubr.bf16.gmra.mxu0 %v380
        %v526 = vpop.f32.mrf.mxu0
        %v527 = vadd.f32 %v241, %v526
        %v528 = vpop.f32.mrf.mxu0
        %v529 = vpop.f32.mrf.mxu0
        %v530 = vadd.f32 %v241, %v529
        %v531 = vpop.f32.mrf.mxu0
        %532 = vmatprep.mubr.bf16.mxu0 0
        %533 = vmatmul.mubr.bf16.gmra.mxu0 %v383
        %v534 = vpop.f32.mrf.mxu0
        %v535 = vadd.f32 %v241, %v534
        %v536 = vpop.f32.mrf.mxu0
        %v537 = vpop.f32.mrf.mxu0
        %v538 = vadd.f32 %v241, %v537
        %v539 = vpop.f32.mrf.mxu0
        %540 = vmatprep.mubr.bf16.mxu0 0
        %541 = vmatmul.mubr.bf16.gmra.mxu0 %v386
        %v542 = vpop.f32.mrf.mxu0
        %v543 = vadd.f32 %v241, %v542
        %v544 = vpop.f32.mrf.mxu0
        %v545 = vpop.f32.mrf.mxu0
        %v546 = vadd.f32 %v241, %v545
        %v547 = vpop.f32.mrf.mxu0
        %548 = vdwg.mxu0
        %v549 = vpack.c.bf16 %v426, %v423
        %v550 = vpack.c.bf16 %v434, %v431
        %v551 = vpack.c.bf16 %v442, %v439
        %v552 = vpack.c.bf16 %v450, %v447
        %v553 = vpack.c.bf16 %v458, %v455
        %v554 = vpack.c.bf16 %v466, %v463
        %v555 = vpack.c.bf16 %v474, %v471
        %v556 = vpack.c.bf16 %v482, %v479
        %v557 = vpack.c.bf16 %v490, %v487
        %v558 = vpack.c.bf16 %v498, %v495
        %v559 = vpack.c.bf16 %v506, %v503
        %v560 = vpack.c.bf16 %v514, %v511
        %v561 = vpack.c.bf16 %v522, %v519
        %v562 = vpack.c.bf16 %v530, %v527
        %v563 = vpack.c.bf16 %v538, %v535
        %v564 = vpack.c.bf16 %v546, %v543
        %v581 = vunpack.c.l.b16 %v549
        %v582 = vunpack.c.h.b16 %v549
        %v583 = vunpack.c.l.b16 %v550
        %v584 = vunpack.c.h.b16 %v550
        %v585 = vunpack.c.l.b16 %v551
        %v586 = vunpack.c.h.b16 %v551
        %v587 = vunpack.c.l.b16 %v552
        %v588 = vunpack.c.h.b16 %v552
        %v589 = vunpack.c.l.b16 %v553
        %v590 = vunpack.c.h.b16 %v553
        %v591 = vunpack.c.l.b16 %v554
        %v592 = vunpack.c.h.b16 %v554
        %v593 = vunpack.c.l.b16 %v555
        %v594 = vunpack.c.h.b16 %v555
        %v595 = vunpack.c.l.b16 %v556
        %v596 = vunpack.c.h.b16 %v556
        %v597 = vunpack.c.l.b16 %v557
        %v598 = vunpack.c.h.b16 %v557
        %v599 = vunpack.c.l.b16 %v558
        %v600 = vunpack.c.h.b16 %v558
        %v601 = vunpack.c.l.b16 %v559
        %v602 = vunpack.c.h.b16 %v559
        %v603 = vunpack.c.l.b16 %v560
        %v604 = vunpack.c.h.b16 %v560
        %v605 = vunpack.c.l.b16 %v561
        %v606 = vunpack.c.h.b16 %v561
        %v607 = vunpack.c.l.b16 %v562
        %v608 = vunpack.c.h.b16 %v562
        %v609 = vunpack.c.l.b16 %v563
        %v610 = vunpack.c.h.b16 %v563
        %v611 = vunpack.c.l.b16 %v564
        %v612 = vunpack.c.h.b16 %v564
        %v613 = vpack.c.b16 %v581, %v581
        %v614 = vpack.c.b16 %v582, %v582
        %v615 = vpack.c.b16 %v583, %v583
        %v616 = vpack.c.b16 %v584, %v584
        %v617 = vpack.c.b16 %v585, %v585
        %v618 = vpack.c.b16 %v586, %v586
        %v619 = vpack.c.b16 %v587, %v587
        %v620 = vpack.c.b16 %v588, %v588
        %v621 = vpack.c.b16 %v589, %v589
        %v622 = vpack.c.b16 %v590, %v590
        %v623 = vpack.c.b16 %v591, %v591
        %v624 = vpack.c.b16 %v592, %v592
        %v625 = vpack.c.b16 %v593, %v593
        %v626 = vpack.c.b16 %v594, %v594
        %v627 = vpack.c.b16 %v595, %v595
        %v628 = vpack.c.b16 %v596, %v596
        %v629 = vpack.c.b16 %v597, %v597
        %v630 = vpack.c.b16 %v598, %v598
        %v631 = vpack.c.b16 %v599, %v599
        %v632 = vpack.c.b16 %v600, %v600
        %v633 = vpack.c.b16 %v601, %v601
        %v634 = vpack.c.b16 %v602, %v602
        %v635 = vpack.c.b16 %v603, %v603
        %v636 = vpack.c.b16 %v604, %v604
        %v637 = vpack.c.b16 %v605, %v605
        %v638 = vpack.c.b16 %v606, %v606
        %v639 = vpack.c.b16 %v607, %v607
        %v640 = vpack.c.b16 %v608, %v608
        %v641 = vpack.c.b16 %v609, %v609
        %v642 = vpack.c.b16 %v610, %v610
        %v643 = vpack.c.b16 %v611, %v611
        %v644 = vpack.c.b16 %v612, %v612
        %vm677 = vcmask 240640
        %678 = vst.msk [vmem:[%s217] sm:$0xf] %vm677, %v613
        %679 = vst.msk [vmem:[%s217 + $0x4] sm:$0xf] %vm677, %v614
        %680 = vst.msk [vmem:[%s217 + $0x8] sm:$0xf] %vm677, %v615
        %681 = vst.msk [vmem:[%s217 + $0xc] sm:$0xf] %vm677, %v616
        %682 = vst.msk [vmem:[%s217 + $0x10] sm:$0xf] %vm677, %v617
        %683 = vst.msk [vmem:[%s217 + $0x14] sm:$0xf] %vm677, %v618
        %684 = vst.msk [vmem:[%s217 + $0x18] sm:$0xf] %vm677, %v619
        %685 = vst.msk [vmem:[%s217 + $0x1c] sm:$0xf] %vm677, %v620
        %686 = vst.msk [vmem:[%s217 + $0x20] sm:$0xf] %vm677, %v621
        %687 = vst.msk [vmem:[%s217 + $0x24] sm:$0xf] %vm677, %v622
        %688 = vst.msk [vmem:[%s217 + $0x28] sm:$0xf] %vm677, %v623
        %689 = vst.msk [vmem:[%s217 + $0x2c] sm:$0xf] %vm677, %v624
        %690 = vst.msk [vmem:[%s217 + $0x30] sm:$0xf] %vm677, %v625
        %691 = vst.msk [vmem:[%s217 + $0x34] sm:$0xf] %vm677, %v626
        %692 = vst.msk [vmem:[%s217 + $0x38] sm:$0xf] %vm677, %v627
        %693 = vst.msk [vmem:[%s217 + $0x3c] sm:$0xf] %vm677, %v628
        %694 = vst.msk [vmem:[%s217 + $0x40] sm:$0xf] %vm677, %v629
        %695 = vst.msk [vmem:[%s217 + $0x44] sm:$0xf] %vm677, %v630
        %696 = vst.msk [vmem:[%s217 + $0x48] sm:$0xf] %vm677, %v631
        %697 = vst.msk [vmem:[%s217 + $0x4c] sm:$0xf] %vm677, %v632
        %698 = vst.msk [vmem:[%s217 + $0x50] sm:$0xf] %vm677, %v633
        %699 = vst.msk [vmem:[%s217 + $0x54] sm:$0xf] %vm677, %v634
        %700 = vst.msk [vmem:[%s217 + $0x58] sm:$0xf] %vm677, %v635
        %701 = vst.msk [vmem:[%s217 + $0x5c] sm:$0xf] %vm677, %v636
        %702 = vst.msk [vmem:[%s217 + $0x60] sm:$0xf] %vm677, %v637
        %703 = vst.msk [vmem:[%s217 + $0x64] sm:$0xf] %vm677, %v638
        %704 = vst.msk [vmem:[%s217 + $0x68] sm:$0xf] %vm677, %v639
        %705 = vst.msk [vmem:[%s217 + $0x6c] sm:$0xf] %vm677, %v640
        %706 = vst.msk [vmem:[%s217 + $0x70] sm:$0xf] %vm677, %v641
        %707 = vst.msk [vmem:[%s217 + $0x74] sm:$0xf] %vm677, %v642
        %708 = vst.msk [vmem:[%s217 + $0x78] sm:$0xf] %vm677, %v643
        %709 = vst.msk [vmem:[%s217 + $0x7c] sm:$0xf] %vm677, %v644
        %s710 = smul.u32 32, %s22
        %p711 = scmp.lt.s32.totalorder %s21, 1
        %s712 = scalar_select %p711, %s21, 1
        %p713 = scmp.lt.s32.totalorder %s710, 31
        %s714 = scalar_select %p713, %s710, 31
        %s715 = smul.addr %s712, 32
        %s716 = sadd.s32 %s714, %s715
        %s717 = smul.addr %s716, 4
        %s718 = scalar_lea.vmem %s3, %s717
        // Predicated region
        $region37: #{tpu_custom_call.1} parent=31 // pred_check
          %p719 = pneg %p119
        $region38: #{tpu_custom_call.1} parent=31 // pred_check_branch
          %721 = sbr.rel (%p719) target = $region40
        $region39: #{tpu_custom_call.1} parent=31 // pred_region
          %s722 = smul.u32 32, %s22
        $region40: #{tpu_custom_call.1} parent=31 // pred_fallthru
          _
      $region32: #{tpu_custom_call.1} parent=5 // pred_fallthru
        _
      %p723 = scmp.le.s32.totalorder 2, %s12
      // Predicated region
      $region41: #{tpu_custom_call.1} parent=5 // pred_check
        %p724 = pneg %p723
      $region42: #{tpu_custom_call.1} parent=5 // pred_check_branch
        %726 = sbr.rel (%p724) target = $region44
      $region43: #{tpu_custom_call.1} parent=5 // pred_region
        %s727 = ssub.s32 %s12, 2
        // Predicated region
        $region45: #{tpu_custom_call.1} parent=43 // pred_check
          %p728 = pneg %p125
        $region46: #{tpu_custom_call.1} parent=43 // pred_check_branch
          %730 = sbr.rel (%p728) target = $region48
        $region47: #{tpu_custom_call.1} parent=43 // pred_region
          %s731 = smul.u32 32, %s24
          %p732 = scmp.lt.s32.totalorder %s23, 1
          %s733 = scalar_select %p732, %s23, 1
          %p734 = scmp.lt.s32.totalorder %s731, 31
          %s735 = scalar_select %p734, %s731, 31
          %s736 = smul.addr %s733, 32
          %s737 = sadd.s32 %s735, %s736
          %s738 = smul.addr %s737, 4
          %s739 = scalar_lea.vmem %s3, %s738
        $region48: #{tpu_custom_call.1} parent=43 // pred_fallthru
          _
      $region44: #{tpu_custom_call.1} parent=5 // pred_fallthru
        _
    $region6: #{tpu_custom_call.1} parent=1 // loop_footer
      %s16 = sadd.s32 1, %s12
    $region7: #{tpu_custom_call.1} parent=1 // loop_footer_branch
      %11 = sbr.rel target = $region3
    $region8: #{tpu_custom_call.1} parent=1 // loop_exit
      _
    %740 = vsyncpa [#allocation3], 1
    %s741 = scalar_lea.sflag [#allocation3], 1
    %742 = vsyncpa %s741, 1

</llo_original>
